<compile_context>
chip_gen: v7x
topology: tpu7x:2x2x1
jax: 0.10.0
libtpu: 0.0.40
codegen_flags: <defaults>
</compile_context>

<pallas_src>
import functools
import math

import jax
import jax.numpy as jnp
from jax.experimental import pallas as pl
from jax.experimental.pallas import tpu as pltpu


# ----------------------------------------------------------------------------
# Fused MLP kernel (transposed layout).
# refs = (xT, w0, b0, w1, b1, ..., wL, bL, outT)
#   xT   : [in_dim, tb]      (batch on lanes)
#   w_i  : [out_i, in_i]     (PyTorch layout, full array resident)
#   b_i  : [out_i, 1]
#   outT : [out_dim, tb]
# ----------------------------------------------------------------------------
def _mlp_kernel(n_layers, *refs):
    xT_ref = refs[0]
    out_ref = refs[-1]
    h = xT_ref[...]                          # native dtype straight into the MXU
    for i in range(n_layers):
        w = refs[1 + 2 * i][...]             # [out_i, in_i]
        b = refs[2 + 2 * i][...]             # [out_i, 1] broadcasts across lanes
        h = jnp.dot(w, h, preferred_element_type=jnp.float32) + b
        if i < n_layers - 1:                 # hidden layers -> Tanh (f32 on EUP)
            h = jnp.tanh(h)
    out_ref[...] = h.astype(out_ref.dtype)


def mlp_forward(x, weights, biases, *, tb=512):
    """Fused MLP forward pass.

    x:       [B, input_dim]
    weights: list of [out_i, in_i] arrays (PyTorch nn.Linear layout)
    biases:  list of [out_i] arrays
    """
    B, in_dim = x.shape
    out_dim = weights[-1].shape[0]
    n_layers = len(weights)

    # Lane tile for the batch axis: multiple of 128, clamped for small batches
    # so tiny problems collapse to a single (or few) grid step(s).
    tb = max(128, (tb // 128) * 128)
    tb = min(tb, pl.cdiv(B, 128) * 128)
    Bp = pl.cdiv(B, tb) * tb                 # padded batch (no ragged tail)

    # Wrapper-side layout plumbing: transpose + zero-pad once (not per step).
    xT = jnp.swapaxes(x, 0, 1)               # [in_dim, B]
    if Bp != B:
        xT = jnp.pad(xT, ((0, 0), (0, Bp - B)))

    args = [xT]
    in_specs = [pl.BlockSpec((in_dim, tb), lambda i: (0, i))]
    for w, b in zip(weights, biases):
        b2 = b.reshape(-1, 1)                # [out_i, 1]
        args += [w, b2]
        # Weights / biases are small: keep the full arrays resident per step.
        in_specs += [
            pl.BlockSpec(w.shape, lambda i: (0, 0)),
            pl.BlockSpec(b2.shape, lambda i: (0, 0)),
        ]

    out_specs = pl.BlockSpec((out_dim, tb), lambda i: (0, i))

    # Advisory cost estimate so XLA can schedule surrounding ops sensibly.
    itemsize = jnp.dtype(x.dtype).itemsize
    flops = 2 * Bp * sum(int(w.shape[0]) * int(w.shape[1]) for w in weights)
    transcendentals = Bp * sum(int(w.shape[0]) for w in weights[:-1])
    bytes_accessed = (
        in_dim * Bp * itemsize
        + out_dim * Bp * itemsize
        + sum(int(w.size) * jnp.dtype(w.dtype).itemsize for w in weights)
        + sum(int(b.size) * jnp.dtype(b.dtype).itemsize for b in biases)
    )
    cost = pl.CostEstimate(
        flops=flops,
        transcendentals=transcendentals,
        bytes_accessed=bytes_accessed,
    )

    kernel = functools.partial(_mlp_kernel, n_layers)
    outT = pl.pallas_call(
        kernel,
        out_shape=jax.ShapeDtypeStruct((out_dim, Bp), x.dtype),
        grid_spec=pltpu.PrefetchScalarGridSpec(
            num_scalar_prefetch=0,
            grid=(Bp // tb,),
            in_specs=in_specs,
            out_specs=out_specs,
        ),
        compiler_params=pltpu.CompilerParams(
            dimension_semantics=("parallel",),
            vmem_limit_bytes=64 << 20,
        ),
        cost_estimate=cost,
    )(*args)

    # Undo the wrapper-side layout plumbing.
    return jnp.swapaxes(outT[:, :B], 0, 1)   # [B, out_dim]


# ----------------------------------------------------------------------------
# Deterministic parameter init (mirrors nn.Linear's U(-1/sqrt(fan_in), ...)),
# weights kept in PyTorch layout [out, in].
# ----------------------------------------------------------------------------
def init_mlp_params(key, input_dim, hidden_dims, output_dim, dtype=jnp.float32):
    dims = [input_dim] + list(hidden_dims) + [output_dim]
    weights, biases = [], []
    for i in range(len(dims) - 1):
        fan_in, fan_out = dims[i], dims[i + 1]
        key, kw, kb = jax.random.split(key, 3)
        bound = 1.0 / math.sqrt(fan_in)
        w = jax.random.uniform(kw, (fan_out, fan_in), dtype, -bound, bound)
        b = jax.random.uniform(kb, (fan_out,), dtype, -bound, bound)
        weights.append(w)
        biases.append(b)
    return weights, biases


def mlp_reference(x, weights, biases):
    """Pure-JAX reference matching the PyTorch forward semantics."""
    h = x
    for i, (w, b) in enumerate(zip(weights, biases)):
        h = h @ w.T + b
        if i < len(weights) - 1:
            h = jnp.tanh(h)
    return h


if __name__ == "__main__":
    # Module config: MLP(input_dim=16, hidden_dims=[32, 32], output_dim=8)
    input_dim, hidden_dims, output_dim = 16, [32, 32], 8
    batch = 16

    key = jax.random.PRNGKey(0)
    key, kx = jax.random.split(key)
    x = jax.random.normal(kx, (batch, input_dim), dtype=jnp.float32)

    weights, biases = init_mlp_params(key, input_dim, hidden_dims, output_dim)

    out = mlp_forward(x, weights, biases)
    out = jax.block_until_ready(out)

    ref = mlp_reference(x, weights, biases)
    assert out.shape == (batch, output_dim)
    assert jnp.allclose(out, ref, atol=1e-5, rtol=1e-5)

    print("KERNEL_OK")
</pallas_src>

<mosaic_0001>
module attributes {stable_mosaic.version = 11 : i64} {
  func.func @_mlp_kernel(%arg0: i32, %arg1: memref<16x128xf32, #tpu.memory_space<vmem>>, %arg2: memref<32x16xf32, #tpu.memory_space<vmem>>, %arg3: memref<32x1xf32, #tpu.memory_space<vmem>>, %arg4: memref<32x32xf32, #tpu.memory_space<vmem>>, %arg5: memref<32x1xf32, #tpu.memory_space<vmem>>, %arg6: memref<8x32xf32, #tpu.memory_space<vmem>>, %arg7: memref<8x1xf32, #tpu.memory_space<vmem>>, %arg8: memref<8x128xf32, #tpu.memory_space<vmem>>) attributes {dimension_semantics = [#tpu.dimension_semantics<parallel>], iteration_bounds = array<i64: 1>, scalar_prefetch = 0 : i64, scratch_operands = 0 : i64, tpu.core_type = #tpu.core_type<tc>, window_params = [{transform_indices = @transform_0, window_bounds = array<i64: 16, 128>}, {pipeline_mode = #tpu.pipeline_mode<synchronous>, transform_indices = @transform_1, window_bounds = array<i64: 32, 16>}, {pipeline_mode = #tpu.pipeline_mode<synchronous>, transform_indices = @transform_2, window_bounds = array<i64: 32, 1>}, {pipeline_mode = #tpu.pipeline_mode<synchronous>, transform_indices = @transform_3, window_bounds = array<i64: 32, 32>}, {pipeline_mode = #tpu.pipeline_mode<synchronous>, transform_indices = @transform_4, window_bounds = array<i64: 32, 1>}, {pipeline_mode = #tpu.pipeline_mode<synchronous>, transform_indices = @transform_5, window_bounds = array<i64: 8, 32>}, {pipeline_mode = #tpu.pipeline_mode<synchronous>, transform_indices = @transform_6, window_bounds = array<i64: 8, 1>}, {transform_indices = @transform_7, window_bounds = array<i64: 8, 128>}]} {
    %c0 = arith.constant 0 : index
    %c0_0 = arith.constant 0 : index
    %0 = vector.load %arg1[%c0, %c0_0] : memref<16x128xf32, #tpu.memory_space<vmem>>, vector<16x128xf32>
    %c0_1 = arith.constant 0 : index
    %c0_2 = arith.constant 0 : index
    %1 = vector.load %arg2[%c0_1, %c0_2] : memref<32x16xf32, #tpu.memory_space<vmem>>, vector<32x16xf32>
    %c0_3 = arith.constant 0 : index
    %c0_4 = arith.constant 0 : index
    %2 = vector.load %arg3[%c0_3, %c0_4] : memref<32x1xf32, #tpu.memory_space<vmem>>, vector<32x1xf32>
    %cst = arith.constant dense<0.000000e+00> : vector<32x128xf32>
    %3 = tpu.matmul %1, %0, %cst {dimension_numbers = #tpu.dot_dimension_numbers<[1], [0], [0], [1], [0, 0, 1, 1], [], []>} : vector<32x16xf32>, vector<16x128xf32>, vector<32x128xf32> -> vector<32x128xf32>
    %4 = vector.broadcast %2 : vector<32x1xf32> to vector<32x128xf32>
    %5 = arith.addf %3, %4 : vector<32x128xf32>
    %6 = math.tanh %5 : vector<32x128xf32>
    %c0_5 = arith.constant 0 : index
    %c0_6 = arith.constant 0 : index
    %7 = vector.load %arg4[%c0_5, %c0_6] : memref<32x32xf32, #tpu.memory_space<vmem>>, vector<32x32xf32>
    %c0_7 = arith.constant 0 : index
    %c0_8 = arith.constant 0 : index
    %8 = vector.load %arg5[%c0_7, %c0_8] : memref<32x1xf32, #tpu.memory_space<vmem>>, vector<32x1xf32>
    %cst_9 = arith.constant dense<0.000000e+00> : vector<32x128xf32>
    %9 = tpu.matmul %7, %6, %cst_9 {dimension_numbers = #tpu.dot_dimension_numbers<[1], [0], [0], [1], [0, 0, 1, 1], [], []>} : vector<32x32xf32>, vector<32x128xf32>, vector<32x128xf32> -> vector<32x128xf32>
    %10 = vector.broadcast %8 : vector<32x1xf32> to vector<32x128xf32>
    %11 = arith.addf %9, %10 : vector<32x128xf32>
    %12 = math.tanh %11 : vector<32x128xf32>
    %c0_10 = arith.constant 0 : index
    %c0_11 = arith.constant 0 : index
    %13 = vector.load %arg6[%c0_10, %c0_11] : memref<8x32xf32, #tpu.memory_space<vmem>>, vector<8x32xf32>
    %c0_12 = arith.constant 0 : index
    %c0_13 = arith.constant 0 : index
    %14 = vector.load %arg7[%c0_12, %c0_13] : memref<8x1xf32, #tpu.memory_space<vmem>>, vector<8x1xf32>
    %cst_14 = arith.constant dense<0.000000e+00> : vector<8x128xf32>
    %15 = tpu.matmul %13, %12, %cst_14 {dimension_numbers = #tpu.dot_dimension_numbers<[1], [0], [0], [1], [0, 0, 1, 1], [], []>} : vector<8x32xf32>, vector<32x128xf32>, vector<8x128xf32> -> vector<8x128xf32>
    %16 = vector.broadcast %14 : vector<8x1xf32> to vector<8x128xf32>
    %17 = arith.addf %15, %16 : vector<8x128xf32>
    %c0_15 = arith.constant 0 : index
    %c0_16 = arith.constant 0 : index
    %18 = vector.load %arg8[%c0_15, %c0_16] : memref<8x128xf32, #tpu.memory_space<vmem>>, vector<8x128xf32>
    tpu.vector_store %arg8[%c0_15, %c0_16], %17 {strides = array<i32>} : memref<8x128xf32, #tpu.memory_space<vmem>>, vector<8x128xf32>,
    return
  }
  func.func @transform_0(%arg0: i32) -> (i32, i32) {
    %c0_i32 = arith.constant 0 : i32
    %c0_i32_0 = arith.constant 0 : i32
    return %c0_i32, %arg0 : i32, i32
  }
  func.func @transform_1(%arg0: i32) -> (i32, i32) {
    %c0_i32 = arith.constant 0 : i32
    %c0_i32_0 = arith.constant 0 : i32
    %c0_i32_1 = arith.constant 0 : i32
    return %c0_i32, %c0_i32_0 : i32, i32
  }
  func.func @transform_2(%arg0: i32) -> (i32, i32) {
    %c0_i32 = arith.constant 0 : i32
    %c0_i32_0 = arith.constant 0 : i32
    %c0_i32_1 = arith.constant 0 : i32
    return %c0_i32, %c0_i32_0 : i32, i32
  }
  func.func @transform_3(%arg0: i32) -> (i32, i32) {
    %c0_i32 = arith.constant 0 : i32
    %c0_i32_0 = arith.constant 0 : i32
    %c0_i32_1 = arith.constant 0 : i32
    return %c0_i32, %c0_i32_0 : i32, i32
  }
  func.func @transform_4(%arg0: i32) -> (i32, i32) {
    %c0_i32 = arith.constant 0 : i32
    %c0_i32_0 = arith.constant 0 : i32
    %c0_i32_1 = arith.constant 0 : i32
    return %c0_i32, %c0_i32_0 : i32, i32
  }
  func.func @transform_5(%arg0: i32) -> (i32, i32) {
    %c0_i32 = arith.constant 0 : i32
    %c0_i32_0 = arith.constant 0 : i32
    %c0_i32_1 = arith.constant 0 : i32
    return %c0_i32, %c0_i32_0 : i32, i32
  }
  func.func @transform_6(%arg0: i32) -> (i32, i32) {
    %c0_i32 = arith.constant 0 : i32
    %c0_i32_0 = arith.constant 0 : i32
    %c0_i32_1 = arith.constant 0 : i32
    return %c0_i32, %c0_i32_0 : i32, i32
  }
  func.func @transform_7(%arg0: i32) -> (i32, i32) {
    %c0_i32 = arith.constant 0 : i32
    %c0_i32_0 = arith.constant 0 : i32
    return %c0_i32, %arg0 : i32, i32
  }
}

</mosaic_0001>

<llo_original>
// kernel: tpu_custom_call.1
$region0: #{tpu_custom_call.1}
  #allocation0 [shape = 'u32[]', space=smem, size = 0x4, offset = 0x4, fixed_abs, tag = 'smem constant byte address 0x4 - core index']
  #allocation1 [shape = 'u32[144,128]{1,0:T(1,128)}', space=vmem, size = 0x12000, scoped, tag = 'internal scratch']
  %s0 = inlined_call_operand.hbm [shape: f32[16,128], index: 0, kind: input, shape index: {}]
  %s1 = inlined_call_operand.hbm [shape: f32[32,16], index: 1, kind: input, shape index: {}]
  %s2 = inlined_call_operand.hbm [shape: f32[32,1], index: 2, kind: input, shape index: {}]
  %s3 = inlined_call_operand.hbm [shape: f32[32,32], index: 3, kind: input, shape index: {}]
  %s4 = inlined_call_operand.hbm [shape: f32[32,1], index: 4, kind: input, shape index: {}]
  %s5 = inlined_call_operand.hbm [shape: f32[8,32], index: 5, kind: input, shape index: {}]
  %s6 = inlined_call_operand.hbm [shape: f32[8,1], index: 6, kind: input, shape index: {}]
  %s7 = inlined_call_operand.hbm [shape: f32[8,128], index: 7, kind: output, shape index: {}]
  %s8 = sld [smem:[#allocation0]]
  $region66: #{tpu_custom_call.1} parent=0
    _
  %s10 = ssub.s32 1, %s8
  %s11 = scalar_select 0, %s10, %s8
  $region1: #{tpu_custom_call.1} parent=0
    #allocation2 [shape = 'u8[8192]{0}', space=vmem, size = 0x2000, scoped, tag = 'input window, operand 0, single buffered']
    #allocation3 [shape = 's32[1]{0}', space=sflag, size = 0x4, scoped, tag = 'scoped memory for tpu_custom_call.1']
    #allocation4 [shape = 's32[1]{0}', space=sflag, size = 0x4, scoped, tag = 'scoped memory for tpu_custom_call.1']
    #allocation5 [shape = 'u8[16384]{0}', space=vmem, size = 0x4000, scoped, tag = 'input window, operand 1, single buffered']
    #allocation6 [shape = 's32[1]{0}', space=sflag, size = 0x4, scoped, tag = 'scoped memory for tpu_custom_call.1']
    #allocation7 [shape = 'u8[16384]{0}', space=vmem, size = 0x4000, scoped, tag = 'input window, operand 2, single buffered']
    #allocation8 [shape = 'u8[16384]{0}', space=vmem, size = 0x4000, scoped, tag = 'input window, operand 3, single buffered']
    #allocation9 [shape = 's32[1]{0}', space=sflag, size = 0x4, scoped, tag = 'scoped memory for tpu_custom_call.1']
    #allocation10 [shape = 'u8[16384]{0}', space=vmem, size = 0x4000, scoped, tag = 'input window, operand 4, single buffered']
    #allocation11 [shape = 'u8[4096]{0}', space=vmem, size = 0x1000, scoped, tag = 'input window, operand 5, single buffered']
    #allocation12 [shape = 's32[1]{0}', space=sflag, size = 0x4, scoped, tag = 'scoped memory for tpu_custom_call.1']
    #allocation13 [shape = 'u8[4096]{0}', space=vmem, size = 0x1000, scoped, tag = 'input window, operand 6, single buffered']
    #allocation14 [shape = 'u8[4096]{0}', space=vmem, size = 0x1000, scoped, tag = 'output window, operand 0, single buffered']
    %12 = vsyncpa [#allocation3], 0
    %13 = vsyncpa [#allocation6], 0
    %14 = vsyncpa [#allocation9], 0
    %15 = vsyncpa [#allocation12], 0
    %16 = vsyncpa [#allocation4], 0
    // Predicated region
    $region2: #{tpu_custom_call.1} parent=1 // pred_check
      _
    $region3: #{tpu_custom_call.1} parent=1 // pred_check_branch
      %18 = sbr.rel (0) target = $region5
    $region4: #{tpu_custom_call.1} parent=1 // pred_region
      %s20 = ssub.s32 256, 256
      %21 = vsyncadd [#allocation3], %s20
      %s22 = sshll.u32 [#allocation2], 4
      %s23 = int_to_ptr.vmem [resolvable:$true] %s22
      %28 = dma.hbm_to_vmem [thread:$0]  %s0, 256, %s23, [#allocation3], 128, 128, 8
    $region5: #{tpu_custom_call.1} parent=1 // pred_fallthru
      _
    // Predicated region
    $region6: #{tpu_custom_call.1} parent=1 // pred_check
      _
    $region7: #{tpu_custom_call.1} parent=1 // pred_check_branch
      %30 = sbr.rel (0) target = $region9
    $region8: #{tpu_custom_call.1} parent=1 // pred_region
      %s32 = ssub.s32 512, 512
      %33 = vsyncadd [#allocation6], %s32
      %s34 = sshll.u32 [#allocation5], 4
      %s35 = int_to_ptr.vmem [resolvable:$true] %s34
      %40 = dma.hbm_to_vmem [thread:$0]  %s1, 512, %s35, [#allocation6], 128, 128, 8
    $region9: #{tpu_custom_call.1} parent=1 // pred_fallthru
      _
    // Predicated region
    $region10: #{tpu_custom_call.1} parent=1 // pred_check
      _
    $region11: #{tpu_custom_call.1} parent=1 // pred_check_branch
      %42 = sbr.rel (0) target = $region13
    $region12: #{tpu_custom_call.1} parent=1 // pred_region
      %s44 = ssub.s32 512, 512
      %45 = vsyncadd [#allocation6], %s44
      %s46 = sshll.u32 [#allocation7], 4
      %s47 = int_to_ptr.vmem [resolvable:$true] %s46
      %52 = dma.hbm_to_vmem [thread:$0]  %s2, 512, %s47, [#allocation6], 128, 128, 8
    $region13: #{tpu_custom_call.1} parent=1 // pred_fallthru
      _
    // Predicated region
    $region14: #{tpu_custom_call.1} parent=1 // pred_check
      _
    $region15: #{tpu_custom_call.1} parent=1 // pred_check_branch
      %54 = sbr.rel (0) target = $region17
    $region16: #{tpu_custom_call.1} parent=1 // pred_region
      %s56 = ssub.s32 512, 512
      %57 = vsyncadd [#allocation9], %s56
      %s58 = sshll.u32 [#allocation8], 4
      %s59 = int_to_ptr.vmem [resolvable:$true] %s58
      %64 = dma.hbm_to_vmem [thread:$0]  %s3, 512, %s59, [#allocation9], 128, 128, 8
    $region17: #{tpu_custom_call.1} parent=1 // pred_fallthru
      _
    // Predicated region
    $region18: #{tpu_custom_call.1} parent=1 // pred_check
      _
    $region19: #{tpu_custom_call.1} parent=1 // pred_check_branch
      %66 = sbr.rel (0) target = $region21
    $region20: #{tpu_custom_call.1} parent=1 // pred_region
      %s68 = ssub.s32 512, 512
      %69 = vsyncadd [#allocation9], %s68
      %s70 = sshll.u32 [#allocation10], 4
      %s71 = int_to_ptr.vmem [resolvable:$true] %s70
      %76 = dma.hbm_to_vmem [thread:$0]  %s4, 512, %s71, [#allocation9], 128, 128, 8
    $region21: #{tpu_custom_call.1} parent=1 // pred_fallthru
      _
    // Predicated region
    $region22: #{tpu_custom_call.1} parent=1 // pred_check
      _
    $region23: #{tpu_custom_call.1} parent=1 // pred_check_branch
      %78 = sbr.rel (0) target = $region25
    $region24: #{tpu_custom_call.1} parent=1 // pred_region
      %s80 = ssub.s32 128, 128
      %81 = vsyncadd [#allocation12], %s80
      %s83 = sshll.u32 [#allocation11], 4
      %s84 = int_to_ptr.vmem [resolvable:$true] %s83
      %86 = dma.hbm_to_vmem [thread:$0]  %s5, 128, %s84, [#allocation12]
    $region25: #{tpu_custom_call.1} parent=1 // pred_fallthru
      _
    // Predicated region
    $region26: #{tpu_custom_call.1} parent=1 // pred_check
      _
    $region27: #{tpu_custom_call.1} parent=1 // pred_check_branch
      %88 = sbr.rel (0) target = $region29
    $region28: #{tpu_custom_call.1} parent=1 // pred_region
      %s90 = ssub.s32 128, 128
      %91 = vsyncadd [#allocation12], %s90
      %s93 = sshll.u32 [#allocation13], 4
      %s94 = int_to_ptr.vmem [resolvable:$true] %s93
      %96 = dma.hbm_to_vmem [thread:$0]  %s6, 128, %s94, [#allocation12]
    $region29: #{tpu_custom_call.1} parent=1 // pred_fallthru
      _
    // Predicated region
    $region30: #{tpu_custom_call.1} parent=1 // pred_check
      _
    $region31: #{tpu_custom_call.1} parent=1 // pred_check_branch
      %98 = sbr.rel (0) target = $region33
    $region32: #{tpu_custom_call.1} parent=1 // pred_region
      %99 = dma.done [#allocation3], 256
    $region33: #{tpu_custom_call.1} parent=1 // pred_fallthru
      _
    // Predicated region
    $region34: #{tpu_custom_call.1} parent=1 // pred_check
      _
    $region35: #{tpu_custom_call.1} parent=1 // pred_check_branch
      %101 = sbr.rel (0) target = $region37
    $region36: #{tpu_custom_call.1} parent=1 // pred_region
      %102 = dma.done [#allocation6], 512
    $region37: #{tpu_custom_call.1} parent=1 // pred_fallthru
      _
    // Predicated region
    $region38: #{tpu_custom_call.1} parent=1 // pred_check
      _
    $region39: #{tpu_custom_call.1} parent=1 // pred_check_branch
      %104 = sbr.rel (0) target = $region41
    $region40: #{tpu_custom_call.1} parent=1 // pred_region
      %105 = dma.done [#allocation6], 512
    $region41: #{tpu_custom_call.1} parent=1 // pred_fallthru
      _
    // Predicated region
    $region42: #{tpu_custom_call.1} parent=1 // pred_check
      _
    $region43: #{tpu_custom_call.1} parent=1 // pred_check_branch
      %107 = sbr.rel (0) target = $region45
    $region44: #{tpu_custom_call.1} parent=1 // pred_region
      %108 = dma.done [#allocation9], 512
    $region45: #{tpu_custom_call.1} parent=1 // pred_fallthru
      _
    // Predicated region
    $region46: #{tpu_custom_call.1} parent=1 // pred_check
      _
    $region47: #{tpu_custom_call.1} parent=1 // pred_check_branch
      %110 = sbr.rel (0) target = $region49
    $region48: #{tpu_custom_call.1} parent=1 // pred_region
      %111 = dma.done [#allocation9], 512
    $region49: #{tpu_custom_call.1} parent=1 // pred_fallthru
      _
    // Predicated region
    $region50: #{tpu_custom_call.1} parent=1 // pred_check
      _
    $region51: #{tpu_custom_call.1} parent=1 // pred_check_branch
      %113 = sbr.rel (0) target = $region53
    $region52: #{tpu_custom_call.1} parent=1 // pred_region
      %114 = dma.done [#allocation12], 128
    $region53: #{tpu_custom_call.1} parent=1 // pred_fallthru
      _
    // Predicated region
    $region54: #{tpu_custom_call.1} parent=1 // pred_check
      _
    $region55: #{tpu_custom_call.1} parent=1 // pred_check_branch
      %116 = sbr.rel (0) target = $region57
    $region56: #{tpu_custom_call.1} parent=1 // pred_region
      %117 = dma.done [#allocation12], 128
    $region57: #{tpu_custom_call.1} parent=1 // pred_fallthru
      _
    %v118 = vld [vmem:[#allocation2] sm:$0xff]
    %v119 = vld [vmem:[#allocation2 + $0x8] sm:$0xff]
    %v120 = vld [vmem:[#allocation5] sm:$0xff]
    %v121 = vld [vmem:[#allocation5 + $0x8] sm:$0xff]
    %v122 = vld [vmem:[#allocation5 + $0x10] sm:$0xff]
    %v123 = vld [vmem:[#allocation5 + $0x18] sm:$0xff]
    %v124 = vld [vmem:[#allocation7] sm:$0xff]
    %v125 = vld [vmem:[#allocation7 + $0x8] sm:$0xff]
    %v126 = vld [vmem:[#allocation7 + $0x10] sm:$0xff]
    %v127 = vld [vmem:[#allocation7 + $0x18] sm:$0xff]
    %129 = vset.pattern.permute.xlu0 0
    %130 = vperm.xlu0 %129, %v124
    %v131 = vpop.permute.xlu0 %130
    %134 = vset.pattern.permute.xlu0 0
    %135 = vperm.xlu0 %134, %v125
    %v136 = vpop.permute.xlu0 %135
    %139 = vset.pattern.permute.xlu0 0
    %140 = vperm.xlu0 %139, %v126
    %v141 = vpop.permute.xlu0 %140
    %144 = vset.pattern.permute.xlu0 0
    %145 = vperm.xlu0 %144, %v127
    %v146 = vpop.permute.xlu0 %145
    %vm148 = vcmask 130048
    %v150 = vsel %vm148, %v120, 0
    %v153 = vsel %vm148, %v121, 0
    %v156 = vsel %vm148, %v122, 0
    %v159 = vsel %vm148, %v123, 0
    %161 = vmatprep.subr.mxu0 0.0
    %162 = vmatpush1.msra.mxu0 %v118
    %163 = vmatprep.subr.mxu0 0.0
    %164 = vmatpush1.msra.mxu0 %v119
    %165 = vmatprep.subr.mxu0 0.0
    %166 = vmatpush1.msra.mxu0 0.0
    %167 = vmatprep.subr.mxu0 0.0
    %168 = vmatpush1.msra.mxu0 0.0
    %169 = vmatprep.subr.mxu0 0.0
    %170 = vmatpush1.msra.mxu0 0.0
    %171 = vmatprep.subr.mxu0 0.0
    %172 = vmatpush1.msra.mxu0 0.0
    %173 = vmatprep.subr.mxu0 0.0
    %174 = vmatpush1.msra.mxu0 0.0
    %175 = vmatprep.subr.mxu0 0.0
    %176 = vmatpush1.msra.mxu0 0.0
    %177 = vmatprep.subr.mxu0 0.0
    %178 = vmatpush1.msra.mxu0 0.0
    %179 = vmatprep.subr.mxu0 0.0
    %180 = vmatpush1.msra.mxu0 0.0
    %181 = vmatprep.subr.mxu0 0.0
    %182 = vmatpush1.msra.mxu0 0.0
    %183 = vmatprep.subr.mxu0 0.0
    %184 = vmatpush1.msra.mxu0 0.0
    %185 = vmatprep.subr.mxu0 0.0
    %186 = vmatpush1.msra.mxu0 0.0
    %187 = vmatprep.subr.mxu0 0.0
    %188 = vmatpush1.msra.mxu0 0.0
    %189 = vmatprep.subr.mxu0 0.0
    %190 = vmatpush1.msra.mxu0 0.0
    %191 = vmatprep.subr.mxu0 0.0
    %192 = vmatpush1.msra.mxu0 0.0
    %193 = vmatprep.subr.mxu0 0.0
    %194 = vmatpush1.msra.mxu0 0.0
    %195 = vmatprep.subr.mxu0 0.0
    %196 = vmatpush1.msra.mxu0 0.0
    %197 = vmatprep.subr.mxu0 0.0
    %198 = vmatpush1.msra.mxu0 0.0
    %199 = vmatprep.subr.mxu0 0.0
    %200 = vmatpush1.msra.mxu0 0.0
    %201 = vmatprep.subr.mxu0 0.0
    %202 = vmatpush1.msra.mxu0 0.0
    %203 = vmatprep.subr.mxu0 0.0
    %204 = vmatpush1.msra.mxu0 0.0
    %205 = vmatprep.subr.mxu0 0.0
    %206 = vmatpush1.msra.mxu0 0.0
    %207 = vmatprep.subr.mxu0 0.0
    %208 = vmatpush1.msra.mxu0 0.0
    %209 = vmatprep.subr.mxu0 0.0
    %210 = vmatpush1.msra.mxu0 0.0
    %211 = vmatprep.subr.mxu0 0.0
    %212 = vmatpush1.msra.mxu0 0.0
    %213 = vmatprep.subr.mxu0 0.0
    %214 = vmatpush1.msra.mxu0 0.0
    %215 = vmatprep.subr.mxu0 0.0
    %216 = vmatpush1.msra.mxu0 0.0
    %217 = vmatprep.subr.mxu0 0.0
    %218 = vmatpush1.msra.mxu0 0.0
    %219 = vmatprep.subr.mxu0 0.0
    %220 = vmatpush1.msra.mxu0 0.0
    %221 = vmatprep.subr.mxu0 0.0
    %222 = vmatpush1.msra.mxu0 0.0
    %223 = vmatprep.subr.mxu0 0.0
    %224 = vmatpush1.msra.mxu0 0.0
    %225 = vmatprep.mubr.f32.mxu0 0.0
    %226 = vmatmul.mubr.f32.gmra.mrb[0].mxu0 %v150
    %v227 = vpop.f32.mrb[0].mxu0
    %v228 = vadd.f32 %v131, %v227
    %v229 = vpop.f32.mrb[0].mxu0
    %230 = vmatprep.mubr.f32.mxu0 0.0
    %231 = vmatmul.mubr.f32.gmra.mrb[0].mxu0 %v153
    %v232 = vpop.f32.mrb[0].mxu0
    %v233 = vadd.f32 %v136, %v232
    %v234 = vpop.f32.mrb[0].mxu0
    %235 = vmatprep.mubr.f32.mxu0 0.0
    %236 = vmatmul.mubr.f32.gmra.mrb[0].mxu0 %v156
    %v237 = vpop.f32.mrb[0].mxu0
    %v238 = vadd.f32 %v141, %v237
    %v239 = vpop.f32.mrb[0].mxu0
    %240 = vmatprep.mubr.f32.mxu0 0.0
    %241 = vmatmul.mubr.f32.gmra.mrb[0].mxu0 %v159
    %v242 = vpop.f32.mrb[0].mxu0
    %v243 = vadd.f32 %v146, %v242
    %v244 = vpop.f32.mrb[0].mxu0
    %245 = vdwg.mxu0
    %v246 = vtanh.pop %v228
    %v247 = vtanh.pop %v233
    %v248 = vtanh.pop %v238
    %v249 = vtanh.pop %v243
    %v250 = vld [vmem:[#allocation8] sm:$0xff]
    %v251 = vld [vmem:[#allocation8 + $0x8] sm:$0xff]
    %v252 = vld [vmem:[#allocation8 + $0x10] sm:$0xff]
    %v253 = vld [vmem:[#allocation8 + $0x18] sm:$0xff]
    %v254 = vld [vmem:[#allocation10] sm:$0xff]
    %v255 = vld [vmem:[#allocation10 + $0x8] sm:$0xff]
    %v256 = vld [vmem:[#allocation10 + $0x10] sm:$0xff]
    %v257 = vld [vmem:[#allocation10 + $0x18] sm:$0xff]
    %259 = vset.pattern.permute.xlu0 0
    %260 = vperm.xlu0 %259, %v254
    %v261 = vpop.permute.xlu0 %260
    %264 = vset.pattern.permute.xlu0 0
    %265 = vperm.xlu0 %264, %v255
    %v266 = vpop.permute.xlu0 %265
    %269 = vset.pattern.permute.xlu0 0
    %270 = vperm.xlu0 %269, %v256
    %v271 = vpop.permute.xlu0 %270
    %274 = vset.pattern.permute.xlu0 0
    %275 = vperm.xlu0 %274, %v257
    %v276 = vpop.permute.xlu0 %275
    %vm278 = vcmask 261120
    %v280 = vsel %vm278, %v250, 0
    %v283 = vsel %vm278, %v251, 0
    %v286 = vsel %vm278, %v252, 0
    %v289 = vsel %vm278, %v253, 0
    %291 = vmatprep.subr.mxu0 0.0
    %292 = vmatpush1.msra.mxu0 %v246
    %293 = vmatprep.subr.mxu0 0.0
    %294 = vmatpush1.msra.mxu0 %v247
    %295 = vmatprep.subr.mxu0 0.0
    %296 = vmatpush1.msra.mxu0 %v248
    %297 = vmatprep.subr.mxu0 0.0
    %298 = vmatpush1.msra.mxu0 %v249
    %299 = vmatprep.subr.mxu0 0.0
    %300 = vmatpush1.msra.mxu0 0.0
    %301 = vmatprep.subr.mxu0 0.0
    %302 = vmatpush1.msra.mxu0 0.0
    %303 = vmatprep.subr.mxu0 0.0
    %304 = vmatpush1.msra.mxu0 0.0
    %305 = vmatprep.subr.mxu0 0.0
    %306 = vmatpush1.msra.mxu0 0.0
    %307 = vmatprep.subr.mxu0 0.0
    %308 = vmatpush1.msra.mxu0 0.0
    %309 = vmatprep.subr.mxu0 0.0
    %310 = vmatpush1.msra.mxu0 0.0
    %311 = vmatprep.subr.mxu0 0.0
    %312 = vmatpush1.msra.mxu0 0.0
    %313 = vmatprep.subr.mxu0 0.0
    %314 = vmatpush1.msra.mxu0 0.0
    %315 = vmatprep.subr.mxu0 0.0
    %316 = vmatpush1.msra.mxu0 0.0
    %317 = vmatprep.subr.mxu0 0.0
    %318 = vmatpush1.msra.mxu0 0.0
    %319 = vmatprep.subr.mxu0 0.0
    %320 = vmatpush1.msra.mxu0 0.0
    %321 = vmatprep.subr.mxu0 0.0
    %322 = vmatpush1.msra.mxu0 0.0
    %323 = vmatprep.subr.mxu0 0.0
    %324 = vmatpush1.msra.mxu0 0.0
    %325 = vmatprep.subr.mxu0 0.0
    %326 = vmatpush1.msra.mxu0 0.0
    %327 = vmatprep.subr.mxu0 0.0
    %328 = vmatpush1.msra.mxu0 0.0
    %329 = vmatprep.subr.mxu0 0.0
    %330 = vmatpush1.msra.mxu0 0.0
    %331 = vmatprep.subr.mxu0 0.0
    %332 = vmatpush1.msra.mxu0 0.0
    %333 = vmatprep.subr.mxu0 0.0
    %334 = vmatpush1.msra.mxu0 0.0
    %335 = vmatprep.subr.mxu0 0.0
    %336 = vmatpush1.msra.mxu0 0.0
    %337 = vmatprep.subr.mxu0 0.0
    %338 = vmatpush1.msra.mxu0 0.0
    %339 = vmatprep.subr.mxu0 0.0
    %340 = vmatpush1.msra.mxu0 0.0
    %341 = vmatprep.subr.mxu0 0.0
    %342 = vmatpush1.msra.mxu0 0.0
    %343 = vmatprep.subr.mxu0 0.0
    %344 = vmatpush1.msra.mxu0 0.0
    %345 = vmatprep.subr.mxu0 0.0
    %346 = vmatpush1.msra.mxu0 0.0
    %347 = vmatprep.subr.mxu0 0.0
    %348 = vmatpush1.msra.mxu0 0.0
    %349 = vmatprep.subr.mxu0 0.0
    %350 = vmatpush1.msra.mxu0 0.0
    %351 = vmatprep.subr.mxu0 0.0
    %352 = vmatpush1.msra.mxu0 0.0
    %353 = vmatprep.subr.mxu0 0.0
    %354 = vmatpush1.msra.mxu0 0.0
    %355 = vmatprep.mubr.f32.mxu0 0.0
    %356 = vmatmul.mubr.f32.gmra.mrb[0].mxu0 %v280
    %v357 = vpop.f32.mrb[0].mxu0
    %v358 = vadd.f32 %v261, %v357
    %v359 = vpop.f32.mrb[0].mxu0
    %360 = vmatprep.mubr.f32.mxu0 0.0
    %361 = vmatmul.mubr.f32.gmra.mrb[0].mxu0 %v283
    %v362 = vpop.f32.mrb[0].mxu0
    %v363 = vadd.f32 %v266, %v362
    %v364 = vpop.f32.mrb[0].mxu0
    %365 = vmatprep.mubr.f32.mxu0 0.0
    %366 = vmatmul.mubr.f32.gmra.mrb[0].mxu0 %v286
    %v367 = vpop.f32.mrb[0].mxu0
    %v368 = vadd.f32 %v271, %v367
    %v369 = vpop.f32.mrb[0].mxu0
    %370 = vmatprep.mubr.f32.mxu0 0.0
    %371 = vmatmul.mubr.f32.gmra.mrb[0].mxu0 %v289
    %v372 = vpop.f32.mrb[0].mxu0
    %v373 = vadd.f32 %v276, %v372
    %v374 = vpop.f32.mrb[0].mxu0
    %375 = vdwg.mxu0
    %v376 = vtanh.pop %v358
    %v377 = vtanh.pop %v363
    %v378 = vtanh.pop %v368
    %v379 = vtanh.pop %v373
    %v380 = vld [vmem:[#allocation11] sm:$0xff]
    %v381 = vld [vmem:[#allocation13] sm:$0xff]
    %383 = vset.pattern.permute.xlu0 0
    %384 = vperm.xlu0 %383, %v381
    %v385 = vpop.permute.xlu0 %384
    %v388 = vsel %vm278, %v380, 0
    %390 = vmatprep.subr.mxu0 0.0
    %391 = vmatpush1.msra.mxu0 %v376
    %392 = vmatprep.subr.mxu0 0.0
    %393 = vmatpush1.msra.mxu0 %v377
    %394 = vmatprep.subr.mxu0 0.0
    %395 = vmatpush1.msra.mxu0 %v378
    %396 = vmatprep.subr.mxu0 0.0
    %397 = vmatpush1.msra.mxu0 %v379
    %398 = vmatprep.subr.mxu0 0.0
    %399 = vmatpush1.msra.mxu0 0.0
    %400 = vmatprep.subr.mxu0 0.0
    %401 = vmatpush1.msra.mxu0 0.0
    %402 = vmatprep.subr.mxu0 0.0
    %403 = vmatpush1.msra.mxu0 0.0
    %404 = vmatprep.subr.mxu0 0.0
    %405 = vmatpush1.msra.mxu0 0.0
    %406 = vmatprep.subr.mxu0 0.0
    %407 = vmatpush1.msra.mxu0 0.0
    %408 = vmatprep.subr.mxu0 0.0
    %409 = vmatpush1.msra.mxu0 0.0
    %410 = vmatprep.subr.mxu0 0.0
    %411 = vmatpush1.msra.mxu0 0.0
    %412 = vmatprep.subr.mxu0 0.0
    %413 = vmatpush1.msra.mxu0 0.0
    %414 = vmatprep.subr.mxu0 0.0
    %415 = vmatpush1.msra.mxu0 0.0
    %416 = vmatprep.subr.mxu0 0.0
    %417 = vmatpush1.msra.mxu0 0.0
    %418 = vmatprep.subr.mxu0 0.0
    %419 = vmatpush1.msra.mxu0 0.0
    %420 = vmatprep.subr.mxu0 0.0
    %421 = vmatpush1.msra.mxu0 0.0
    %422 = vmatprep.subr.mxu0 0.0
    %423 = vmatpush1.msra.mxu0 0.0
    %424 = vmatprep.subr.mxu0 0.0
    %425 = vmatpush1.msra.mxu0 0.0
    %426 = vmatprep.subr.mxu0 0.0
    %427 = vmatpush1.msra.mxu0 0.0
    %428 = vmatprep.subr.mxu0 0.0
    %429 = vmatpush1.msra.mxu0 0.0
    %430 = vmatprep.subr.mxu0 0.0
    %431 = vmatpush1.msra.mxu0 0.0
    %432 = vmatprep.subr.mxu0 0.0
    %433 = vmatpush1.msra.mxu0 0.0
    %434 = vmatprep.subr.mxu0 0.0
    %435 = vmatpush1.msra.mxu0 0.0
    %436 = vmatprep.subr.mxu0 0.0
    %437 = vmatpush1.msra.mxu0 0.0
    %438 = vmatprep.subr.mxu0 0.0
    %439 = vmatpush1.msra.mxu0 0.0
    %440 = vmatprep.subr.mxu0 0.0
    %441 = vmatpush1.msra.mxu0 0.0
    %442 = vmatprep.subr.mxu0 0.0
    %443 = vmatpush1.msra.mxu0 0.0
    %444 = vmatprep.subr.mxu0 0.0
    %445 = vmatpush1.msra.mxu0 0.0
    %446 = vmatprep.subr.mxu0 0.0
    %447 = vmatpush1.msra.mxu0 0.0
    %448 = vmatprep.subr.mxu0 0.0
    %449 = vmatpush1.msra.mxu0 0.0
    %450 = vmatprep.subr.mxu0 0.0
    %451 = vmatpush1.msra.mxu0 0.0
    %452 = vmatprep.subr.mxu0 0.0
    %453 = vmatpush1.msra.mxu0 0.0
    %454 = vmatprep.mubr.f32.mxu0 0.0
    %455 = vmatmul.mubr.f32.gmra.mrb[0].mxu0 %v388
    %v456 = vpop.f32.mrb[0].mxu0
    %v457 = vadd.f32 %v385, %v456
    %v458 = vpop.f32.mrb[0].mxu0
    %459 = vdwg.mxu0
    %460 = vst [vmem:[#allocation14] sm:$0xff] %v457
    // Predicated region
    $region58: #{tpu_custom_call.1} parent=1 // pred_check
      _
    $region59: #{tpu_custom_call.1} parent=1 // pred_check_branch
      %462 = sbr.rel (0) target = $region61
    $region60: #{tpu_custom_call.1} parent=1 // pred_region
      %s464 = ssub.s32 128, 128
      %465 = vsyncadd [#allocation4], %s464
      %s467 = sshll.u32 [#allocation14], 4
      %s468 = int_to_ptr.vmem [resolvable:$true] %s467
      %470 = dma.vmem_to_hbm [thread:$0]  %s468, 128, %s7, [#allocation4]
    $region61: #{tpu_custom_call.1} parent=1 // pred_fallthru
      _
    // Predicated region
    $region62: #{tpu_custom_call.1} parent=1 // pred_check
      _
    $region63: #{tpu_custom_call.1} parent=1 // pred_check_branch
      %472 = sbr.rel (0) target = $region65
    $region64: #{tpu_custom_call.1} parent=1 // pred_region
      %473 = dma.done [#allocation4], 128
    $region65: #{tpu_custom_call.1} parent=1 // pred_fallthru
      _
    %474 = vsyncpa [#allocation3], 1
    %475 = vsyncpa [#allocation6], 1
    %476 = vsyncpa [#allocation9], 1
    %477 = vsyncpa [#allocation12], 1
    %478 = vsyncpa [#allocation4], 1

</llo_original>
